<compile_context>
chip_gen: v7x
topology: tpu7x:2x2x1
jax: 0.10.0
libtpu: 0.0.40
codegen_flags: <defaults>
</compile_context>

<pallas_src>
import jax
import jax.numpy as jnp
from jax.experimental import pallas as pl
from jax.experimental.pallas import tpu as pltpu


def ffnn_kernel(x_ref, w1_ref, b1_ref, w2_ref, b2_ref, w3_ref, b3_ref, o_ref):
    x = x_ref[...]

    # fc1 + ReLU  (bf16 MXU operands, f32 accumulate)
    h1 = jnp.dot(x.astype(jnp.bfloat16), w1_ref[...].astype(jnp.bfloat16),
                 preferred_element_type=jnp.float32) + b1_ref[...]
    h1 = jnp.maximum(h1, 0.0)

    # fc2 + ReLU
    h2 = jnp.dot(h1.astype(jnp.bfloat16), w2_ref[...].astype(jnp.bfloat16),
                 preferred_element_type=jnp.float32) + b2_ref[...]
    h2 = jnp.maximum(h2, 0.0)

    # fc3 (out_features=1): VPU broadcast-mul + 32-lane reduce instead of an N=1 MXU matmul.
    z = jnp.sum(h2 * w3_ref[...], axis=-1, keepdims=True) + b3_ref[...]

    # Sigmoid via EUP: exp + approximate reciprocal (both on the otherwise-idle EUP slot).
    o_ref[...] = pl.reciprocal(1.0 + jnp.exp(-z), approx=True).astype(o_ref.dtype)


def _round_up(n, m):
    return ((n + m - 1) // m) * m


def ffnn_forward(x, params, tile_b=1024):
    """x: (B, input_size) float32 -> (B, 1) float32."""
    w1, b1, w2, b2, w3, b3 = params
    B, D = x.shape

    # fc3 weight as a lane-dense (1, 32) row for the VPU/XLU path; bias as (1, 1).
    w3_row = w3.reshape(1, -1)
    b3 = b3.reshape(1, 1)

    # Batch tiling: large tiles amortize per-grid-step overhead; weights stay VMEM-resident.
    # At input_size=32 a double-buffered x tile of 1024 rows is only ~256 KiB, far under
    # even v7x's VMEM budget.  TODO(synk): re-derive tile_b vs. vmem_limit_bytes if
    # input_size ever grows to many-thousands of features (v7x has half the VMEM of v6e).
    tile_b = min(tile_b, _round_up(B, 8))
    padded_b = _round_up(B, tile_b)
    if padded_b != B:
        x = jnp.pad(x, ((0, padded_b - B), (0, 0)))
    grid = (padded_b // tile_b,)

    def const_spec(shape):
        # Same block every grid step -> fetched once, resident in VMEM.
        return pl.BlockSpec(shape, lambda i: (0, 0))

    out = pl.pallas_call(
        ffnn_kernel,
        out_shape=jax.ShapeDtypeStruct((padded_b, 1), jnp.float32),
        grid=grid,
        in_specs=[
            pl.BlockSpec((tile_b, D), lambda i: (i, 0)),      # x streamed over batch
            const_spec(w1.shape), const_spec(b1.shape),       # resident weights/biases
            const_spec(w2.shape), const_spec(b2.shape),
            const_spec(w3_row.shape), const_spec(b3.shape),
        ],
        out_specs=pl.BlockSpec((tile_b, 1), lambda i: (i, 0)),
        compiler_params=pltpu.CompilerParams(
            dimension_semantics=("parallel",)),               # megacore split on v7x
    )(x, w1, b1, w2, b2, w3_row, b3)
    return out[:B]


def init_params(key, input_size):
    """Deterministic init mimicking nn.Linear's U(-1/sqrt(fan_in), 1/sqrt(fan_in))."""
    dims = [(input_size, 64), (64, 32), (32, 1)]
    params = []
    for (fan_in, fan_out) in dims:
        key, kw, kb = jax.random.split(key, 3)
        bound = 1.0 / jnp.sqrt(fan_in)
        w = jax.random.uniform(kw, (fan_in, fan_out), jnp.float32, -bound, bound)
        b = jax.random.uniform(kb, (1, fan_out), jnp.float32, -bound, bound)
        params += [w, b]
    return params


def _reference(x, params):
    w1, b1, w2, b2, w3, b3 = params
    h1 = jnp.maximum(x @ w1 + b1, 0.0)
    h2 = jnp.maximum(h1 @ w2 + b2, 0.0)
    return jax.nn.sigmoid(h2 @ w3 + b3)


if __name__ == "__main__":
    key = jax.random.PRNGKey(0)
    batch, input_size = 8, 32

    key, kx = jax.random.split(key)
    x = jax.random.normal(kx, (batch, input_size), jnp.float32)
    params = init_params(key, input_size)

    out = ffnn_forward(x, params)
    jax.block_until_ready(out)
    assert out.shape == (batch, 1)
    # bf16 MXU operands + approx reciprocal -> loosen tolerance vs. the f32 reference.
    assert jnp.allclose(out, _reference(x, params), atol=2e-2, rtol=2e-2)

    # Exercise the multi-tile grid + batch-padding path (grid=(3,), tile_b=8).
    key, kx2 = jax.random.split(key)
    x2 = jax.random.normal(kx2, (20, input_size), jnp.float32)
    out2 = ffnn_forward(x2, params, tile_b=8)
    jax.block_until_ready(out2)
    assert out2.shape == (20, 1)
    assert jnp.allclose(out2, _reference(x2, params), atol=2e-2, rtol=2e-2)

    print("KERNEL_OK")
</pallas_src>

<mosaic_0001>
module attributes {stable_mosaic.version = 11 : i64} {
  func.func @ffnn_kernel(%arg0: i32, %arg1: memref<8x32xf32, #tpu.memory_space<vmem>>, %arg2: memref<32x64xf32, #tpu.memory_space<vmem>>, %arg3: memref<1x64xf32, #tpu.memory_space<vmem>>, %arg4: memref<64x32xf32, #tpu.memory_space<vmem>>, %arg5: memref<1x32xf32, #tpu.memory_space<vmem>>, %arg6: memref<1x32xf32, #tpu.memory_space<vmem>>, %arg7: memref<1x1xf32, #tpu.memory_space<vmem>>, %arg8: memref<8x1xf32, #tpu.memory_space<vmem>>) attributes {dimension_semantics = [#tpu.dimension_semantics<parallel>], iteration_bounds = array<i64: 1>, scalar_prefetch = 0 : i64, scratch_operands = 0 : i64, tpu.core_type = #tpu.core_type<tc>, window_params = [{transform_indices = @transform_0, window_bounds = array<i64: 8, 32>}, {pipeline_mode = #tpu.pipeline_mode<synchronous>, transform_indices = @transform_1, window_bounds = array<i64: 32, 64>}, {pipeline_mode = #tpu.pipeline_mode<synchronous>, transform_indices = @transform_2, window_bounds = array<i64: 1, 64>}, {pipeline_mode = #tpu.pipeline_mode<synchronous>, transform_indices = @transform_3, window_bounds = array<i64: 64, 32>}, {pipeline_mode = #tpu.pipeline_mode<synchronous>, transform_indices = @transform_4, window_bounds = array<i64: 1, 32>}, {pipeline_mode = #tpu.pipeline_mode<synchronous>, transform_indices = @transform_5, window_bounds = array<i64: 1, 32>}, {pipeline_mode = #tpu.pipeline_mode<synchronous>, transform_indices = @transform_6, window_bounds = array<i64: 1, 1>}, {transform_indices = @transform_7, window_bounds = array<i64: 8, 1>}]} {
    %c0 = arith.constant 0 : index
    %c0_0 = arith.constant 0 : index
    %0 = vector.load %arg1[%c0, %c0_0] : memref<8x32xf32, #tpu.memory_space<vmem>>, vector<8x32xf32>
    %1 = arith.truncf %0 : vector<8x32xf32> to vector<8x32xbf16>
    %c0_1 = arith.constant 0 : index
    %c0_2 = arith.constant 0 : index
    %2 = vector.load %arg2[%c0_1, %c0_2] : memref<32x64xf32, #tpu.memory_space<vmem>>, vector<32x64xf32>
    %3 = arith.truncf %2 : vector<32x64xf32> to vector<32x64xbf16>
    %cst = arith.constant dense<0.000000e+00> : vector<8x64xf32>
    %4 = tpu.matmul %1, %3, %cst {dimension_numbers = #tpu.dot_dimension_numbers<[1], [0], [0], [1], [0, 0, 1, 1], [], []>} : vector<8x32xbf16>, vector<32x64xbf16>, vector<8x64xf32> -> vector<8x64xf32>
    %c0_3 = arith.constant 0 : index
    %c0_4 = arith.constant 0 : index
    %5 = vector.load %arg3[%c0_3, %c0_4] : memref<1x64xf32, #tpu.memory_space<vmem>>, vector<1x64xf32>
    %6 = vector.broadcast %5 : vector<1x64xf32> to vector<8x64xf32>
    %7 = arith.addf %4, %6 : vector<8x64xf32>
    %cst_5 = arith.constant 0.000000e+00 : f32
    %8 = vector.broadcast %cst_5 : f32 to vector<8x64xf32>
    %9 = arith.maximumf %7, %8 : vector<8x64xf32>
    %10 = arith.truncf %9 : vector<8x64xf32> to vector<8x64xbf16>
    %c0_6 = arith.constant 0 : index
    %c0_7 = arith.constant 0 : index
    %11 = vector.load %arg4[%c0_6, %c0_7] : memref<64x32xf32, #tpu.memory_space<vmem>>, vector<64x32xf32>
    %12 = arith.truncf %11 : vector<64x32xf32> to vector<64x32xbf16>
    %cst_8 = arith.constant dense<0.000000e+00> : vector<8x32xf32>
    %13 = tpu.matmul %10, %12, %cst_8 {dimension_numbers = #tpu.dot_dimension_numbers<[1], [0], [0], [1], [0, 0, 1, 1], [], []>} : vector<8x64xbf16>, vector<64x32xbf16>, vector<8x32xf32> -> vector<8x32xf32>
    %c0_9 = arith.constant 0 : index
    %c0_10 = arith.constant 0 : index
    %14 = vector.load %arg5[%c0_9, %c0_10] : memref<1x32xf32, #tpu.memory_space<vmem>>, vector<1x32xf32>
    %15 = vector.broadcast %14 : vector<1x32xf32> to vector<8x32xf32>
    %16 = arith.addf %13, %15 : vector<8x32xf32>
    %cst_11 = arith.constant 0.000000e+00 : f32
    %17 = vector.broadcast %cst_11 : f32 to vector<8x32xf32>
    %18 = arith.maximumf %16, %17 : vector<8x32xf32>
    %c0_12 = arith.constant 0 : index
    %c0_13 = arith.constant 0 : index
    %19 = vector.load %arg6[%c0_12, %c0_13] : memref<1x32xf32, #tpu.memory_space<vmem>>, vector<1x32xf32>
    %20 = vector.broadcast %19 : vector<1x32xf32> to vector<8x32xf32>
    %21 = arith.mulf %18, %20 : vector<8x32xf32>
    %cst_14 = arith.constant dense<0.000000e+00> : vector<8xf32>
    %22 = vector.multi_reduction <add>, %21, %cst_14 [1] : vector<8x32xf32> to vector<8xf32>
    %23 = vector.shape_cast %22 : vector<8xf32> to vector<8x1xf32>
    %c0_15 = arith.constant 0 : index
    %c0_16 = arith.constant 0 : index
    %24 = vector.load %arg7[%c0_15, %c0_16] : memref<1x1xf32, #tpu.memory_space<vmem>>, vector<1x1xf32>
    %25 = vector.broadcast %24 : vector<1x1xf32> to vector<8x1xf32>
    %26 = arith.addf %23, %25 : vector<8x1xf32>
    %cst_17 = arith.constant 0.000000e+00 : f32
    %27 = vector.broadcast %cst_17 : f32 to vector<8x1xf32>
    %28 = arith.subf %27, %26 : vector<8x1xf32>
    %29 = math.exp %28 : vector<8x1xf32>
    %cst_18 = arith.constant 1.000000e+00 : f32
    %30 = vector.broadcast %cst_18 : f32 to vector<8x1xf32>
    %31 = arith.addf %30, %29 : vector<8x1xf32>
    %32 = tpu.reciprocal %31 {approx = true} : vector<8x1xf32> -> vector<8x1xf32>
    %c0_19 = arith.constant 0 : index
    %c0_20 = arith.constant 0 : index
    %33 = vector.load %arg8[%c0_19, %c0_20] : memref<8x1xf32, #tpu.memory_space<vmem>>, vector<8x1xf32>
    tpu.vector_store %arg8[%c0_19, %c0_20], %32 {strides = array<i32>} : memref<8x1xf32, #tpu.memory_space<vmem>>, vector<8x1xf32>,
    return
  }
  func.func @transform_0(%arg0: i32) -> (i32, i32) {
    %c0_i32 = arith.constant 0 : i32
    %c0_i32_0 = arith.constant 0 : i32
    return %arg0, %c0_i32 : i32, i32
  }
  func.func @transform_1(%arg0: i32) -> (i32, i32) {
    %c0_i32 = arith.constant 0 : i32
    %c0_i32_0 = arith.constant 0 : i32
    %c0_i32_1 = arith.constant 0 : i32
    return %c0_i32, %c0_i32_0 : i32, i32
  }
  func.func @transform_2(%arg0: i32) -> (i32, i32) {
    %c0_i32 = arith.constant 0 : i32
    %c0_i32_0 = arith.constant 0 : i32
    %c0_i32_1 = arith.constant 0 : i32
    return %c0_i32, %c0_i32_0 : i32, i32
  }
  func.func @transform_3(%arg0: i32) -> (i32, i32) {
    %c0_i32 = arith.constant 0 : i32
    %c0_i32_0 = arith.constant 0 : i32
    %c0_i32_1 = arith.constant 0 : i32
    return %c0_i32, %c0_i32_0 : i32, i32
  }
  func.func @transform_4(%arg0: i32) -> (i32, i32) {
    %c0_i32 = arith.constant 0 : i32
    %c0_i32_0 = arith.constant 0 : i32
    %c0_i32_1 = arith.constant 0 : i32
    return %c0_i32, %c0_i32_0 : i32, i32
  }
  func.func @transform_5(%arg0: i32) -> (i32, i32) {
    %c0_i32 = arith.constant 0 : i32
    %c0_i32_0 = arith.constant 0 : i32
    %c0_i32_1 = arith.constant 0 : i32
    return %c0_i32, %c0_i32_0 : i32, i32
  }
  func.func @transform_6(%arg0: i32) -> (i32, i32) {
    %c0_i32 = arith.constant 0 : i32
    %c0_i32_0 = arith.constant 0 : i32
    %c0_i32_1 = arith.constant 0 : i32
    return %c0_i32, %c0_i32_0 : i32, i32
  }
  func.func @transform_7(%arg0: i32) -> (i32, i32) {
    %c0_i32 = arith.constant 0 : i32
    %c0_i32_0 = arith.constant 0 : i32
    return %arg0, %c0_i32 : i32, i32
  }
}

</mosaic_0001>

<llo_original>
// kernel: tpu_custom_call.1
$region0: #{tpu_custom_call.1}
  #allocation0 [shape = 'u32[]', space=smem, size = 0x4, offset = 0x4, fixed_abs, tag = 'smem constant byte address 0x4 - core index']
  #allocation1 [shape = 'u32[144,128]{1,0:T(1,128)}', space=vmem, size = 0x12000, scoped, tag = 'internal scratch']
  #allocation2 [shape = 'f32[1,1]{1,0:T(1,128)S(1)}', space=vmem, size = 0x200, scoped, tag = 'scoped memory for tpu_custom_call.1']
  %s0 = inlined_call_operand.vmem [shape: f32[8,32], index: 0, kind: input, shape index: {}]
  %s1 = inlined_call_operand.vmem [shape: f32[32,64], index: 1, kind: input, shape index: {}]
  %s2 = inlined_call_operand.vmem [shape: f32[1,64], index: 2, kind: input, shape index: {}]
  %s3 = inlined_call_operand.vmem [shape: f32[64,32], index: 3, kind: input, shape index: {}]
  %s4 = inlined_call_operand.vmem [shape: f32[1,32], index: 4, kind: input, shape index: {}]
  %s5 = inlined_call_operand.vmem [shape: f32[1,32], index: 5, kind: input, shape index: {}]
  %s6 = inlined_call_operand.<no memory space> [shape: f32[1,1], index: 6, kind: input, shape index: {}]
  %s7 = inlined_call_operand.vmem [shape: f32[8,1], index: 7, kind: output, shape index: {}]
  %s8 = sld [smem:[#allocation0]]
  $region38: #{tpu_custom_call.1} parent=0
    _
  %s10 = ssub.s32 1, %s8
  %s11 = scalar_select 0, %s10, %s8
  %v12 = vstv %s6
  %13 = vst [vmem:[#allocation2] sm:$0x1] %v12
  // Predicated region
  $region2: #{tpu_custom_call.1} parent=0 // pred_check
    _
  $region3: #{tpu_custom_call.1} parent=0 // pred_check_branch
    %15 = sbr.rel (0) target = $region5
  $region4: #{tpu_custom_call.1} parent=0 // pred_region
    _
  $region5: #{tpu_custom_call.1} parent=0 // pred_fallthru
    _
  // Predicated region
  $region6: #{tpu_custom_call.1} parent=0 // pred_check
    _
  $region7: #{tpu_custom_call.1} parent=0 // pred_check_branch
    %17 = sbr.rel (0) target = $region9
  $region8: #{tpu_custom_call.1} parent=0 // pred_region
    _
  $region9: #{tpu_custom_call.1} parent=0 // pred_fallthru
    _
  // Predicated region
  $region10: #{tpu_custom_call.1} parent=0 // pred_check
    _
  $region11: #{tpu_custom_call.1} parent=0 // pred_check_branch
    %19 = sbr.rel (0) target = $region13
  $region12: #{tpu_custom_call.1} parent=0 // pred_region
    _
  $region13: #{tpu_custom_call.1} parent=0 // pred_fallthru
    _
  // Predicated region
  $region14: #{tpu_custom_call.1} parent=0 // pred_check
    _
  $region15: #{tpu_custom_call.1} parent=0 // pred_check_branch
    %21 = sbr.rel (0) target = $region17
  $region16: #{tpu_custom_call.1} parent=0 // pred_region
    _
  $region17: #{tpu_custom_call.1} parent=0 // pred_fallthru
    _
  // Predicated region
  $region18: #{tpu_custom_call.1} parent=0 // pred_check
    _
  $region19: #{tpu_custom_call.1} parent=0 // pred_check_branch
    %23 = sbr.rel (0) target = $region21
  $region20: #{tpu_custom_call.1} parent=0 // pred_region
    _
  $region21: #{tpu_custom_call.1} parent=0 // pred_fallthru
    _
  // Predicated region
  $region22: #{tpu_custom_call.1} parent=0 // pred_check
    _
  $region23: #{tpu_custom_call.1} parent=0 // pred_check_branch
    %25 = sbr.rel (0) target = $region25
  $region24: #{tpu_custom_call.1} parent=0 // pred_region
    _
  $region25: #{tpu_custom_call.1} parent=0 // pred_fallthru
    _
  // Predicated region
  $region26: #{tpu_custom_call.1} parent=0 // pred_check
    _
  $region27: #{tpu_custom_call.1} parent=0 // pred_check_branch
    %27 = sbr.rel (0) target = $region29
  $region28: #{tpu_custom_call.1} parent=0 // pred_region
    _
  $region29: #{tpu_custom_call.1} parent=0 // pred_fallthru
    _
  %v29 = vld [vmem:[%s0] sm:$0xff]
  %v30 = vpack.c.bf16 %v29, %v29
  %v31 = vld [vmem:[%s1] sm:$0xff]
  %v32 = vld [vmem:[%s1 + $0x8] sm:$0xff]
  %v33 = vld [vmem:[%s1 + $0x10] sm:$0xff]
  %v34 = vld [vmem:[%s1 + $0x18] sm:$0xff]
  %v35 = vpack.c.bf16 %v32, %v31
  %v36 = vpack.c.bf16 %v34, %v33
  %v37 = vld [vmem:[%s2] sm:$0x1]
  %v39 = vlaneseq
  %v40 = vshrl.u32 %v39, 7
  %v41 = vsub.s32 0, %v40
  %v42 = vrot.slane %v37, %v41
  %vm44 = vcmask 261120
  %v46 = vsel %vm44, %v30, 0
  %48 = vmatprep.subr.bf16.mxu0 0
  %49 = vmatpush1.bf16.msra.mxu0 %v35
  %50 = vmatprep.subr.bf16.mxu0 0
  %51 = vmatpush1.bf16.msra.mxu0 %v36
  %52 = vmatprep.subr.bf16.mxu0 0
  %53 = vmatpush1.bf16.msra.mxu0 0
  %54 = vmatprep.subr.bf16.mxu0 0
  %55 = vmatpush1.bf16.msra.mxu0 0
  %56 = vmatprep.subr.bf16.mxu0 0
  %57 = vmatpush1.bf16.msra.mxu0 0
  %58 = vmatprep.subr.bf16.mxu0 0
  %59 = vmatpush1.bf16.msra.mxu0 0
  %60 = vmatprep.subr.bf16.mxu0 0
  %61 = vmatpush1.bf16.msra.mxu0 0
  %62 = vmatprep.subr.bf16.mxu0 0
  %63 = vmatpush1.bf16.msra.mxu0 0
  %64 = vmatprep.subr.bf16.mxu0 0
  %65 = vmatpush1.bf16.msra.mxu0 0
  %66 = vmatprep.subr.bf16.mxu0 0
  %67 = vmatpush1.bf16.msra.mxu0 0
  %68 = vmatprep.subr.bf16.mxu0 0
  %69 = vmatpush1.bf16.msra.mxu0 0
  %70 = vmatprep.subr.bf16.mxu0 0
  %71 = vmatpush1.bf16.msra.mxu0 0
  %72 = vmatprep.subr.bf16.mxu0 0
  %73 = vmatpush1.bf16.msra.mxu0 0
  %74 = vmatprep.subr.bf16.mxu0 0
  %75 = vmatpush1.bf16.msra.mxu0 0
  %76 = vmatprep.subr.bf16.mxu0 0
  %77 = vmatpush1.bf16.msra.mxu0 0
  %78 = vmatprep.subr.bf16.mxu0 0
  %79 = vmatpush1.bf16.msra.mxu0 0
  %80 = vmatprep.mubr.bf16.mxu0 0
  %81 = vmatmul.mubr.bf16.gmra.mrb[0].mxu0 %v46
  %v82 = vpop.f32.mrb[0].mxu0
  %v83 = vadd.f32 %v42, %v82
  %v84 = vpop.f32.mrb[0].mxu0
  %v85 = vpop.f32.mrb[0].mxu0
  %v86 = vpop.f32.mrb[0].mxu0
  %87 = vdwg.mxu0
  %v88 = vmax.f32 %v83, 0.0
  %v89 = vpack.c.bf16 %v88, %v88
  %v90 = vld [vmem:[%s3] sm:$0xff]
  %v91 = vld [vmem:[%s3 + $0x8] sm:$0xff]
  %v92 = vld [vmem:[%s3 + $0x10] sm:$0xff]
  %v93 = vld [vmem:[%s3 + $0x18] sm:$0xff]
  %v94 = vld [vmem:[%s3 + $0x20] sm:$0xff]
  %v95 = vld [vmem:[%s3 + $0x28] sm:$0xff]
  %v96 = vld [vmem:[%s3 + $0x30] sm:$0xff]
  %v97 = vld [vmem:[%s3 + $0x38] sm:$0xff]
  %v98 = vpack.c.bf16 %v91, %v90
  %v99 = vpack.c.bf16 %v93, %v92
  %v100 = vpack.c.bf16 %v95, %v94
  %v101 = vpack.c.bf16 %v97, %v96
  %v102 = vld [vmem:[%s4] sm:$0x1]
  %v104 = vlaneseq
  %v105 = vshrl.u32 %v104, 7
  %v106 = vsub.s32 0, %v105
  %v107 = vrot.slane %v102, %v106
  %vm109 = vcmask 523264
  %v111 = vsel %vm109, %v89, 0
  %113 = vmatprep.subr.bf16.mxu0 0
  %114 = vmatpush1.bf16.msra.mxu0 %v98
  %115 = vmatprep.subr.bf16.mxu0 0
  %116 = vmatpush1.bf16.msra.mxu0 %v99
  %117 = vmatprep.subr.bf16.mxu0 0
  %118 = vmatpush1.bf16.msra.mxu0 %v100
  %119 = vmatprep.subr.bf16.mxu0 0
  %120 = vmatpush1.bf16.msra.mxu0 %v101
  %121 = vmatprep.subr.bf16.mxu0 0
  %122 = vmatpush1.bf16.msra.mxu0 0
  %123 = vmatprep.subr.bf16.mxu0 0
  %124 = vmatpush1.bf16.msra.mxu0 0
  %125 = vmatprep.subr.bf16.mxu0 0
  %126 = vmatpush1.bf16.msra.mxu0 0
  %127 = vmatprep.subr.bf16.mxu0 0
  %128 = vmatpush1.bf16.msra.mxu0 0
  %129 = vmatprep.subr.bf16.mxu0 0
  %130 = vmatpush1.bf16.msra.mxu0 0
  %131 = vmatprep.subr.bf16.mxu0 0
  %132 = vmatpush1.bf16.msra.mxu0 0
  %133 = vmatprep.subr.bf16.mxu0 0
  %134 = vmatpush1.bf16.msra.mxu0 0
  %135 = vmatprep.subr.bf16.mxu0 0
  %136 = vmatpush1.bf16.msra.mxu0 0
  %137 = vmatprep.subr.bf16.mxu0 0
  %138 = vmatpush1.bf16.msra.mxu0 0
  %139 = vmatprep.subr.bf16.mxu0 0
  %140 = vmatpush1.bf16.msra.mxu0 0
  %141 = vmatprep.subr.bf16.mxu0 0
  %142 = vmatpush1.bf16.msra.mxu0 0
  %143 = vmatprep.subr.bf16.mxu0 0
  %144 = vmatpush1.bf16.msra.mxu0 0
  %145 = vmatprep.mubr.bf16.mxu0 0
  %146 = vmatmul.mubr.bf16.gmra.mrb[0].mxu0 %v111
  %v147 = vpop.f32.mrb[0].mxu0
  %v148 = vadd.f32 %v107, %v147
  %v149 = vpop.f32.mrb[0].mxu0
  %v150 = vpop.f32.mrb[0].mxu0
  %v151 = vpop.f32.mrb[0].mxu0
  %152 = vdwg.mxu0
  %v153 = vmax.f32 %v148, 0.0
  %v154 = vld [vmem:[%s5] sm:$0x1]
  %v156 = vlaneseq
  %v157 = vshrl.u32 %v156, 7
  %v158 = vsub.s32 0, %v157
  %v159 = vrot.slane %v154, %v158
  %v161 = vmul.f32 %v153, %v159
  %v162 = vsel %vm44, %v161, 0.0
  %163 = vadd.xlane.f32.xlu0 %v162
  %v164 = vpop.xlane.xlu0 %163
  %v165 = vld [vmem:[#allocation2] sm:$0x1]
  %v167 = vlaneseq
  %v168 = vshrl.u32 %v167, 7
  %v169 = vsub.s32 0, %v168
  %v170 = vrot.slane %v165, %v169
  %v172 = vadd.f32 %v164, %v170
  %v173 = vsub.f32 0.0, %v172
  %v174 = vmul.f32 %v173, 1.442695
  %v175 = vpow.pop %v174
  %v176 = vadd.f32 %v175, 1.0
  %v177 = vrcp.pop %v176
  %vm178 = vcmask 7168
  %179 = vst.msk [vmem:[%s7] sm:$0xff] %vm178, %v177
  // Predicated region
  $region30: #{tpu_custom_call.1} parent=0 // pred_check
    _
  $region31: #{tpu_custom_call.1} parent=0 // pred_check_branch
    %181 = sbr.rel (0) target = $region33
  $region32: #{tpu_custom_call.1} parent=0 // pred_region
    _
  $region33: #{tpu_custom_call.1} parent=0 // pred_fallthru
    _
  // Predicated region
  $region34: #{tpu_custom_call.1} parent=0 // pred_check
    _
  $region35: #{tpu_custom_call.1} parent=0 // pred_check_branch
    %183 = sbr.rel (0) target = $region37
  $region36: #{tpu_custom_call.1} parent=0 // pred_region
    _
  $region37: #{tpu_custom_call.1} parent=0 // pred_fallthru
    _

</llo_original>
